<compile_context>
chip_gen: v5e
topology: v5e:2x2
jax: 0.10.0
libtpu: 0.0.40
codegen_flags: <defaults>
</compile_context>

<pallas_src>
import jax
import jax.numpy as jnp
from jax.experimental import pallas as pl
from jax.experimental.pallas import tpu as pltpu


def _pos_embed_kernel(col_ref, row_ref, out_ref):
    # col_ref : (res_len, F)            column-embedding table (fully resident)
    # row_ref : (res_len, F)            row-embedding table    (fully resident)
    # out_ref : (chunk, res_len, 2F)    output rows a in [i*chunk, (i+1)*chunk)
    res_len, feats = col_ref.shape
    chunk = out_ref.shape[0]
    i = pl.program_id(0)

    col = col_ref[...].astype(out_ref.dtype)                 # (R, F)
    if chunk == res_len:
        # Single-chunk (default / 1-TC) path: no dynamic slice needed.
        row = row_ref[...].astype(out_ref.dtype)             # (R, F)
    else:
        # Per-chunk rows for this grid step (tables stay resident in VMEM).
        row = row_ref[pl.ds(i * chunk, chunk), :].astype(out_ref.dtype)

    # Two static-slice half stores — no (chunk, R, 2F) concat temporary.
    out_ref[:, :, 0:feats] = jnp.broadcast_to(
        col[None, :, :], (chunk, res_len, feats))
    out_ref[:, :, feats:2 * feats] = jnp.broadcast_to(
        row[:, None, :], (chunk, res_len, feats))


def _default_num_chunks(res_len):
    # v7x has 2 TensorCores per chip -> split the HBM writeback in two.
    # On single-TC parts (v5e/v6e) extra grid steps are pure overhead.
    try:
        kind = jax.devices()[0].device_kind.lower()
    except Exception:  # pragma: no cover - defensive only
        kind = ""
    if "v7" in kind and res_len % 2 == 0:
        return 2
    return 1


def position_embedding_learned(col_weight, row_weight, *, num_chunks=None,
                               out_dtype=None):
    """col_weight, row_weight: (res_len, num_pos_feats) embedding tables.

    Returns pos of shape (1, res_len*res_len, 2*num_pos_feats), matching the
    PyTorch module's forward().
    """
    res_len, feats = col_weight.shape
    assert row_weight.shape == (res_len, feats)
    if out_dtype is None:
        out_dtype = col_weight.dtype
    if num_chunks is None:
        num_chunks = _default_num_chunks(res_len)
    assert res_len % num_chunks == 0, (res_len, num_chunks)
    chunk = res_len // num_chunks

    in_bytes = 2 * res_len * feats * jnp.dtype(col_weight.dtype).itemsize
    out_bytes = res_len * res_len * 2 * feats * jnp.dtype(out_dtype).itemsize

    out3d = pl.pallas_call(
        _pos_embed_kernel,
        out_shape=jax.ShapeDtypeStruct((res_len, res_len, 2 * feats),
                                       out_dtype),
        grid=(num_chunks,),
        in_specs=[
            # Tables stay fully resident across grid steps.
            pl.BlockSpec((res_len, feats), lambda i: (0, 0)),
            pl.BlockSpec((res_len, feats), lambda i: (0, 0)),
        ],
        # Block's last two dims equal the full array dims (res_len, 2F), so
        # the (8,128) rule holds for any res_len (incl. the default 28) and
        # stores stay lane-dense; only the leading `a` axis is chunked.
        out_specs=pl.BlockSpec((chunk, res_len, 2 * feats),
                               lambda i: (i, 0, 0)),
        compiler_params=pltpu.CompilerParams(
            dimension_semantics=("parallel",)),
        cost_estimate=pl.CostEstimate(flops=0, transcendentals=0,
                                      bytes_accessed=in_bytes + out_bytes),
    )(col_weight, row_weight)

    # Free row-major reshape + batch dim (unsqueeze(0)) in the wrapper.
    return out3d.reshape(1, res_len * res_len, 2 * feats)


def _reference(col_weight, row_weight):
    # Pure-JAX reference reproducing the PyTorch forward exactly.
    res_len, feats = col_weight.shape
    x_rep = jnp.broadcast_to(col_weight[None, :, :], (res_len, res_len, feats))
    y_rep = jnp.broadcast_to(row_weight[:, None, :], (res_len, res_len, feats))
    pos = jnp.concatenate([x_rep, y_rep], axis=-1)
    return pos.reshape(-1, 2 * feats)[None, :, :]


def _run_case(num_pos_feats, res_length, seed=0, num_chunks=None,
              out_dtype=None):
    key = jax.random.PRNGKey(seed)
    k_row, k_col = jax.random.split(key)
    # nn.init.uniform_ -> U[0, 1)
    row_weight = jax.random.uniform(k_row, (res_length, num_pos_feats),
                                    dtype=jnp.float32)
    col_weight = jax.random.uniform(k_col, (res_length, num_pos_feats),
                                    dtype=jnp.float32)

    pos = position_embedding_learned(col_weight, row_weight,
                                     num_chunks=num_chunks,
                                     out_dtype=out_dtype)
    pos = jax.block_until_ready(pos)

    ref = _reference(col_weight, row_weight)
    if out_dtype is not None:
        ref = ref.astype(out_dtype)
    assert pos.shape == (1, res_length * res_length, 2 * num_pos_feats), pos.shape
    assert pos.dtype == ref.dtype, (pos.dtype, ref.dtype)
    assert jnp.allclose(pos, ref), (
        f"mismatch vs reference (F={num_pos_feats}, R={res_length}, "
        f"chunks={num_chunks}, dtype={out_dtype})")


if __name__ == "__main__":
    # Small synthetic config (PRNGKey(0), fast smoke test).
    _run_case(num_pos_feats=32, res_length=8)
    # Module-default config (res_length=28 is NOT a multiple of 8); chunk
    # count auto-selected from the device (1 on v5e/v6e, 2 on v7x).
    _run_case(num_pos_feats=256, res_length=28)
    # Explicitly exercise the 2-chunk (dual-TensorCore) path on any hardware.
    _run_case(num_pos_feats=256, res_length=28, num_chunks=2)
    # bf16 output path for bf16 consumers (deviates from fp32 module numerics).
    _run_case(num_pos_feats=32, res_length=8, out_dtype=jnp.bfloat16)

    print("KERNEL_OK")
</pallas_src>

<mosaic_0001>
module attributes {stable_mosaic.version = 11 : i64} {
  func.func @_pos_embed_kernel(%arg0: i32, %arg1: memref<8x32xf32, #tpu.memory_space<vmem>>, %arg2: memref<8x32xf32, #tpu.memory_space<vmem>>, %arg3: memref<8x8x64xf32, #tpu.memory_space<vmem>>) attributes {dimension_semantics = [#tpu.dimension_semantics<parallel>], iteration_bounds = array<i64: 1>, scalar_prefetch = 0 : i64, scratch_operands = 0 : i64, tpu.core_type = #tpu.core_type<tc>, window_params = [{pipeline_mode = #tpu.pipeline_mode<synchronous>, transform_indices = @transform_0, window_bounds = array<i64: 8, 32>}, {pipeline_mode = #tpu.pipeline_mode<synchronous>, transform_indices = @transform_1, window_bounds = array<i64: 8, 32>}, {transform_indices = @transform_2, window_bounds = array<i64: 8, 8, 64>}]} {
    %c0 = arith.constant 0 : index
    %c0_0 = arith.constant 0 : index
    %0 = vector.load %arg1[%c0, %c0_0] : memref<8x32xf32, #tpu.memory_space<vmem>>, vector<8x32xf32>
    %c0_1 = arith.constant 0 : index
    %c0_2 = arith.constant 0 : index
    %1 = vector.load %arg2[%c0_1, %c0_2] : memref<8x32xf32, #tpu.memory_space<vmem>>, vector<8x32xf32>
    %2 = vector.shape_cast %0 : vector<8x32xf32> to vector<1x8x32xf32>
    %3 = vector.shape_cast %2 : vector<1x8x32xf32> to vector<1x8x32xf32>
    %4 = vector.broadcast %3 : vector<1x8x32xf32> to vector<8x8x32xf32>
    %c0_3 = arith.constant 0 : index
    %c0_4 = arith.constant 0 : index
    %c0_5 = arith.constant 0 : index
    %5 = vector.load %arg3[%c0_3, %c0_4, %c0_5] : memref<8x8x64xf32, #tpu.memory_space<vmem>>, vector<8x8x32xf32>
    tpu.vector_store %arg3[%c0_3, %c0_4, %c0_5], %4 {strides = array<i32>} : memref<8x8x64xf32, #tpu.memory_space<vmem>>, vector<8x8x32xf32>,
    %6 = vector.shape_cast %1 : vector<8x32xf32> to vector<8x1x32xf32>
    %7 = vector.shape_cast %6 : vector<8x1x32xf32> to vector<8x1x32xf32>
    %8 = vector.broadcast %7 : vector<8x1x32xf32> to vector<8x8x32xf32>
    %c0_6 = arith.constant 0 : index
    %c0_7 = arith.constant 0 : index
    %c32 = arith.constant 32 : index
    %9 = vector.load %arg3[%c0_6, %c0_7, %c32] : memref<8x8x64xf32, #tpu.memory_space<vmem>>, vector<8x8x32xf32>
    tpu.vector_store %arg3[%c0_6, %c0_7, %c32], %8 {strides = array<i32>} : memref<8x8x64xf32, #tpu.memory_space<vmem>>, vector<8x8x32xf32>,
    return
  }
  func.func @transform_0(%arg0: i32) -> (i32, i32) {
    %c0_i32 = arith.constant 0 : i32
    %c0_i32_0 = arith.constant 0 : i32
    %c0_i32_1 = arith.constant 0 : i32
    return %c0_i32, %c0_i32_0 : i32, i32
  }
  func.func @transform_1(%arg0: i32) -> (i32, i32) {
    %c0_i32 = arith.constant 0 : i32
    %c0_i32_0 = arith.constant 0 : i32
    %c0_i32_1 = arith.constant 0 : i32
    return %c0_i32, %c0_i32_0 : i32, i32
  }
  func.func @transform_2(%arg0: i32) -> (i32, i32, i32) {
    %c0_i32 = arith.constant 0 : i32
    %c0_i32_0 = arith.constant 0 : i32
    %c0_i32_1 = arith.constant 0 : i32
    return %arg0, %c0_i32, %c0_i32_0 : i32, i32, i32
  }
}

</mosaic_0001>

<llo_original>
// kernel: tpu_custom_call.1
$region0: #{tpu_custom_call.1}
  #allocation0 [shape = 'u32[]', space=smem, size = 0x4, offset = 0x4, fixed_abs, tag = 'smem constant byte address 0x4 - core index']
  #allocation1 [shape = 'u32[72,128]{1,0:T(1,128)}', space=vmem, size = 0x9000, scoped, tag = 'internal scratch']
  %s0 = inlined_call_operand.hbm [shape: f32[8,32], index: 0, kind: input, shape index: {}]
  %s1 = inlined_call_operand.hbm [shape: f32[8,32], index: 1, kind: input, shape index: {}]
  %s2 = inlined_call_operand.hbm [shape: f32[8,8,64], index: 2, kind: output, shape index: {}]
  %s3 = sld [smem:[#allocation0]]
  $region26: #{tpu_custom_call.1} parent=0
    _
  %s5 = ssub.s32 1, %s3
  %s6 = scalar_select 0, %s5, %s3
  $region1: #{tpu_custom_call.1} parent=0
    #allocation2 [shape = 'u8[4096]{0}', space=vmem, size = 0x1000, scoped, tag = 'input window, operand 0, single buffered']
    #allocation3 [shape = 's32[1]{0}', space=sflag, size = 0x4, scoped, tag = 'scoped memory for tpu_custom_call.1']
    #allocation4 [shape = 's32[1]{0}', space=sflag, size = 0x4, scoped, tag = 'scoped memory for tpu_custom_call.1']
    #allocation5 [shape = 'u8[4096]{0}', space=vmem, size = 0x1000, scoped, tag = 'input window, operand 1, single buffered']
    #allocation6 [shape = 's32[1]{0}', space=sflag, size = 0x4, scoped, tag = 'scoped memory for tpu_custom_call.1']
    #allocation7 [shape = 'u8[32768]{0}', space=vmem, size = 0x8000, scoped, tag = 'output window, operand 0, single buffered']
    %7 = vsyncpa [#allocation3], 0
    %8 = vsyncpa [#allocation6], 0
    %9 = vsyncpa [#allocation4], 0
    // Predicated region
    $region2: #{tpu_custom_call.1} parent=1 // pred_check
      _
    $region3: #{tpu_custom_call.1} parent=1 // pred_check_branch
      %11 = sbr.rel (0) target = $region5
    $region4: #{tpu_custom_call.1} parent=1 // pred_region
      %13 = vsyncadd [#allocation3], 0
      %s15 = sshll.u32 %s0, 4
      %s16 = int_to_ptr.hbm [resolvable:$true] %s15
      %s17 = sshll.u32 [#allocation2], 4
      %s18 = int_to_ptr.vmem [resolvable:$true] %s17
      %20 = dma.hbm_to_vmem [thread:$0]  %s16, 128, %s18, [#allocation3]
    $region5: #{tpu_custom_call.1} parent=1 // pred_fallthru
      _
    // Predicated region
    $region6: #{tpu_custom_call.1} parent=1 // pred_check
      _
    $region7: #{tpu_custom_call.1} parent=1 // pred_check_branch
      %22 = sbr.rel (0) target = $region9
    $region8: #{tpu_custom_call.1} parent=1 // pred_region
      %24 = vsyncadd [#allocation6], 0
      %s26 = sshll.u32 %s1, 4
      %s27 = int_to_ptr.hbm [resolvable:$true] %s26
      %s28 = sshll.u32 [#allocation5], 4
      %s29 = int_to_ptr.vmem [resolvable:$true] %s28
      %31 = dma.hbm_to_vmem [thread:$0]  %s27, 128, %s29, [#allocation6]
    $region9: #{tpu_custom_call.1} parent=1 // pred_fallthru
      _
    // Predicated region
    $region10: #{tpu_custom_call.1} parent=1 // pred_check
      _
    $region11: #{tpu_custom_call.1} parent=1 // pred_check_branch
      %33 = sbr.rel (0) target = $region13
    $region12: #{tpu_custom_call.1} parent=1 // pred_region
      %35 = dma.done [#allocation3], 128
    $region13: #{tpu_custom_call.1} parent=1 // pred_fallthru
      _
    // Predicated region
    $region14: #{tpu_custom_call.1} parent=1 // pred_check
      _
    $region15: #{tpu_custom_call.1} parent=1 // pred_check_branch
      %37 = sbr.rel (0) target = $region17
    $region16: #{tpu_custom_call.1} parent=1 // pred_region
      %39 = dma.done [#allocation6], 128
    $region17: #{tpu_custom_call.1} parent=1 // pred_fallthru
      _
    %v40 = vld [vmem:[#allocation2] sm:$0xff]
    %v41 = vld [vmem:[#allocation5] sm:$0xff]
    %vm42 = vcmask 261120
    %43 = vst.msk [vmem:[#allocation7] sm:$0xff] %vm42, %v40
    %44 = vst.msk [vmem:[#allocation7 + $0x8] sm:$0xff] %vm42, %v40
    %45 = vst.msk [vmem:[#allocation7 + $0x10] sm:$0xff] %vm42, %v40
    %46 = vst.msk [vmem:[#allocation7 + $0x18] sm:$0xff] %vm42, %v40
    %47 = vst.msk [vmem:[#allocation7 + $0x20] sm:$0xff] %vm42, %v40
    %48 = vst.msk [vmem:[#allocation7 + $0x28] sm:$0xff] %vm42, %v40
    %49 = vst.msk [vmem:[#allocation7 + $0x30] sm:$0xff] %vm42, %v40
    %50 = vst.msk [vmem:[#allocation7 + $0x38] sm:$0xff] %vm42, %v40
    %v52 = vrot.slane %v41, 1
    %v53 = vrot.slane %v41, 2
    %v54 = vrot.slane %v41, 3
    %v55 = vrot.slane %v41, 4
    %v56 = vrot.slane %v41, 5
    %v57 = vrot.slane %v41, 6
    %v58 = vrot.slane %v41, 7
    %v59 = vperm.slane %v41, 0
    %v60 = vperm.slane %v52, 0
    %v61 = vperm.slane %v53, 0
    %v62 = vperm.slane %v54, 0
    %v63 = vperm.slane %v55, 0
    %v64 = vperm.slane %v56, 0
    %v65 = vperm.slane %v57, 0
    %v66 = vperm.slane %v58, 0
    %67 = vrot.lane.b32.xlu0 %v59, 32
    %v68 = vpop.permute.xlu0 %67
    %69 = vrot.lane.b32.xlu0 %v60, 32
    %v70 = vpop.permute.xlu0 %69
    %71 = vrot.lane.b32.xlu0 %v61, 32
    %v72 = vpop.permute.xlu0 %71
    %73 = vrot.lane.b32.xlu0 %v62, 32
    %v74 = vpop.permute.xlu0 %73
    %75 = vrot.lane.b32.xlu0 %v63, 32
    %v76 = vpop.permute.xlu0 %75
    %77 = vrot.lane.b32.xlu0 %v64, 32
    %v78 = vpop.permute.xlu0 %77
    %79 = vrot.lane.b32.xlu0 %v65, 32
    %v80 = vpop.permute.xlu0 %79
    %81 = vrot.lane.b32.xlu0 %v66, 32
    %v82 = vpop.permute.xlu0 %81
    %vm91 = vcmask 523520
    %92 = vst.msk [vmem:[#allocation7] sm:$0xff] %vm91, %v68
    %93 = vst.msk [vmem:[#allocation7 + $0x8] sm:$0xff] %vm91, %v70
    %94 = vst.msk [vmem:[#allocation7 + $0x10] sm:$0xff] %vm91, %v72
    %95 = vst.msk [vmem:[#allocation7 + $0x18] sm:$0xff] %vm91, %v74
    %96 = vst.msk [vmem:[#allocation7 + $0x20] sm:$0xff] %vm91, %v76
    %97 = vst.msk [vmem:[#allocation7 + $0x28] sm:$0xff] %vm91, %v78
    %98 = vst.msk [vmem:[#allocation7 + $0x30] sm:$0xff] %vm91, %v80
    %99 = vst.msk [vmem:[#allocation7 + $0x38] sm:$0xff] %vm91, %v82
    // Predicated region
    $region18: #{tpu_custom_call.1} parent=1 // pred_check
      _
    $region19: #{tpu_custom_call.1} parent=1 // pred_check_branch
      %101 = sbr.rel (0) target = $region21
    $region20: #{tpu_custom_call.1} parent=1 // pred_region
      %103 = vsyncadd [#allocation4], 0
      %s104 = sshll.u32 [#allocation7], 4
      %s105 = int_to_ptr.vmem [resolvable:$true] %s104
      %s106 = sshll.u32 %s2, 4
      %s107 = int_to_ptr.hbm [resolvable:$true] %s106
      %112 = dma.vmem_to_hbm [thread:$0]  %s105, 1024, %s107, [#allocation4], 128, 128, 8
    $region21: #{tpu_custom_call.1} parent=1 // pred_fallthru
      _
    // Predicated region
    $region22: #{tpu_custom_call.1} parent=1 // pred_check
      _
    $region23: #{tpu_custom_call.1} parent=1 // pred_check_branch
      %114 = sbr.rel (0) target = $region25
    $region24: #{tpu_custom_call.1} parent=1 // pred_region
      %116 = dma.done [#allocation4], 1024
    $region25: #{tpu_custom_call.1} parent=1 // pred_fallthru
      _
    %117 = vsyncpa [#allocation3], 1
    %118 = vsyncpa [#allocation6], 1
    %119 = vsyncpa [#allocation4], 1

</llo_original>
